<compile_context>
chip_gen: v7x
topology: tpu7x:2x2x1
jax: 0.10.0
libtpu: 0.0.40
codegen_flags: <defaults>
</compile_context>

<pallas_src>
import functools

import jax
import jax.numpy as jnp
from jax.experimental import pallas as pl
from jax.experimental.pallas import tpu as pltpu

LANE = 128            # TPU lane width; the fused activation space
CONST_LANE = LANE - 1  # lane 127 carries a constant 1.0 (bias folding)
NUM_FUSED = 4          # fused (128,128) matmul stages after stage 0


def _round_up(a, m):
    return -(-a // m) * m


# --------------------------------------------------------------------------
# Pallas kernel: entire Net forward for one row tile.
# --------------------------------------------------------------------------
def net_kernel(x_ref, w0_ref, b0_ref, w_ref, out_ref, *, num_tasks, out_dim):
    """
    x_ref  : (TB, in_dim)    un-padded input rows
    w0_ref : (in_dim, 128)   stage-0 fused weight: x -> [h_own | h_share]
    b0_ref : (1, 128)        stage-0 fused bias; lane 127 == 1.0 seeds the
                             constant lane used by later stages for bias folding
    w_ref  : (4, 128, 128)   stages 1-4, biases folded into row 127
                             (w[i,127,127] = 1 keeps the constant-1 lane alive)
    out_ref: (TB, 128)       packed output: cols [0:out_dim) = `out`,
                             cols [out_dim:out_dim+num_tasks) = task softmax, rest 0
    """
    relu = lambda v: jnp.maximum(v, 0.0)
    dot = lambda a, b: jnp.dot(a, b, preferred_element_type=jnp.float32)

    x = x_ref[...]
    h = relu(dot(x, w0_ref[...]) + b0_ref[...])  # [h_own | h_share], lane127 = 1
    f = relu(dot(h, w_ref[0]))                   # [out_own | out_share]
    g = dot(f, w_ref[1])                         # cols [0:O) = last(out) (NO relu),
                                                 # cols [O:O+h0) = classifier-L1 preact
    c = relu(dot(relu(g), w_ref[2]))             # classifier hidden-2
    l = dot(c, w_ref[3])                         # classifier logits at cols [O:O+T)

    # Masked softmax over the task lanes only.  Mask BEFORE the exp so the
    # discarded lanes become exp(-inf) = 0 exactly (no inf*0 hazard).
    col = jax.lax.broadcasted_iota(jnp.int32, (1, LANE), 1)
    tmask = (col >= out_dim) & (col < out_dim + num_tasks)
    lm = jnp.where(tmask, l, -jnp.inf)
    m = jnp.max(lm, axis=1, keepdims=True)
    e = jnp.exp(lm - m)
    task = e * pl.reciprocal(jnp.sum(e, axis=1, keepdims=True), approx=True)

    # Single lane-dense store: [0:O) = out, [O:O+T) = task, rest 0.
    out_ref[...] = jnp.where(col < out_dim, g, task)


# --------------------------------------------------------------------------
# Host-side parameter packing (built once).
# Invariant: every lane/row not explicitly set below must stay exactly zero,
# and lane CONST_LANE must carry 1.0 into every stage that folds a bias.
# --------------------------------------------------------------------------
def pack_params(p, in_dim, h0, h1, num_tasks, out_dim):
    L, C = LANE, CONST_LANE

    # stage 0: x -> [h_own | h_share]; explicit bias (lane C seeds constant 1)
    w0 = jnp.zeros((in_dim, L), jnp.float32)
    w0 = w0.at[:, 0:h0].set(p["fo_w1"])
    w0 = w0.at[:, h0:2 * h0].set(p["fs_w1"])
    b0 = jnp.zeros((1, L), jnp.float32)
    b0 = b0.at[:, 0:h0].set(p["fo_b1"])
    b0 = b0.at[:, h0:2 * h0].set(p["fs_b1"])
    b0 = b0.at[0, C].set(1.0)

    w = jnp.zeros((NUM_FUSED, L, L), jnp.float32)

    # stage 1: block-diagonal layer-2 -> [out_own | out_share]
    w = w.at[0, 0:h0, 0:h1].set(p["fo_w2"])
    w = w.at[0, h0:2 * h0, h1:2 * h1].set(p["fs_w2"])
    w = w.at[0, C, 0:h1].set(p["fo_b2"][0])
    w = w.at[0, C, h1:2 * h1].set(p["fs_b2"][0])
    w = w.at[0, C, C].set(1.0)

    # stage 2: 'last' Linear (both concat halves) -> cols [0:O);
    #          classifier layer-1 on out_share    -> cols [O:O+h0)
    w = w.at[1, 0:h1, 0:out_dim].set(p["l_w_own"])
    w = w.at[1, h1:2 * h1, 0:out_dim].set(p["l_w_share"])
    w = w.at[1, h1:2 * h1, out_dim:out_dim + h0].set(p["c_w1"])
    w = w.at[1, C, 0:out_dim].set(p["l_b"][0])
    w = w.at[1, C, out_dim:out_dim + h0].set(p["c_b1"][0])
    w = w.at[1, C, C].set(1.0)

    # stage 3: classifier layer-2 -> cols [0:h1)
    w = w.at[2, out_dim:out_dim + h0, 0:h1].set(p["c_w2"])
    w = w.at[2, C, 0:h1].set(p["c_b2"][0])
    w = w.at[2, C, C].set(1.0)

    # stage 4: classifier output layer -> logits at cols [O:O+T)
    w = w.at[3, 0:h1, out_dim:out_dim + num_tasks].set(p["c_w3"])
    w = w.at[3, C, out_dim:out_dim + num_tasks].set(p["c_b3"][0])
    return w0, b0, w


# --------------------------------------------------------------------------
# Wrapper
# --------------------------------------------------------------------------
def net_forward(x, params, hidden_shapes, num_tasks, output_shape):
    B, in_dim = x.shape
    assert len(hidden_shapes) == 2, "this kernel fuses exactly 2 hidden layers"
    h0, h1 = int(hidden_shapes[0]), int(hidden_shapes[-1])
    # lane CONST_LANE is reserved for the constant-1 bias lane
    assert 2 * h0 <= CONST_LANE and 2 * h1 <= CONST_LANE
    assert output_shape + h0 <= CONST_LANE
    assert output_shape + num_tasks <= CONST_LANE

    w0, b0, w_slab = pack_params(params, in_dim, h0, h1, num_tasks, output_shape)

    # Row tiling: one step for small batches; for large batches use big tiles
    # (~1024 rows) with an EVEN number of grid steps so v7x's two TensorCores
    # split the "parallel" axis evenly.
    if B <= 128:
        n_steps = 1
        tb = max(8, _round_up(B, 8))
    else:
        n_steps = max(2, 2 * (-(-B // 2048)))       # even, >= 2
        tb = _round_up(-(-B // n_steps), 8)
    pb = n_steps * tb

    x_in = x.astype(jnp.float32)
    if pb != B:
        x_in = jnp.zeros((pb, in_dim), jnp.float32).at[:B].set(x_in)

    kernel = functools.partial(net_kernel, num_tasks=num_tasks, out_dim=output_shape)
    packed = pl.pallas_call(
        kernel,
        out_shape=jax.ShapeDtypeStruct((pb, LANE), jnp.float32),
        grid=(n_steps,),
        in_specs=[
            pl.BlockSpec((tb, in_dim), lambda i: (i, 0)),        # x rows (un-padded)
            pl.BlockSpec((in_dim, LANE), lambda i: (0, 0)),      # stage-0 weight
            pl.BlockSpec((1, LANE), lambda i: (0, 0)),           # stage-0 bias
            pl.BlockSpec((NUM_FUSED, LANE, LANE), lambda i: (0, 0, 0)),  # stages 1-4
        ],
        out_specs=pl.BlockSpec((tb, LANE), lambda i: (i, 0)),
        compiler_params=pltpu.CompilerParams(dimension_semantics=("parallel",)),
    )(x_in, w0, b0, w_slab)

    out = packed[:B, :output_shape]
    task_output = packed[:B, output_shape:output_shape + num_tasks]
    return out, task_output


# --------------------------------------------------------------------------
# Deterministic parameter construction + pure-JAX reference
# --------------------------------------------------------------------------
def make_params(key, state_dim, num_tasks, hidden_shapes, output_shape):
    in_dim = state_dim + num_tasks
    feat_dim = hidden_shapes[-1]

    def linear(k, fan_in, fan_out, scale=0.1):
        kw, kb = jax.random.split(k)
        w = scale * jax.random.normal(kw, (fan_in, fan_out), jnp.float32)
        b = scale * jax.random.normal(kb, (1, fan_out), jnp.float32)
        return w, b

    keys = jax.random.split(key, 9)
    p = {}
    p["fo_w1"], p["fo_b1"] = linear(keys[0], in_dim, hidden_shapes[0])
    p["fo_w2"], p["fo_b2"] = linear(keys[1], hidden_shapes[0], hidden_shapes[1])
    p["fs_w1"], p["fs_b1"] = linear(keys[2], in_dim, hidden_shapes[0])
    p["fs_w2"], p["fs_b2"] = linear(keys[3], hidden_shapes[0], hidden_shapes[1])
    p["c_w1"], p["c_b1"] = linear(keys[4], feat_dim, hidden_shapes[0])
    p["c_w2"], p["c_b2"] = linear(keys[5], hidden_shapes[0], hidden_shapes[1])
    p["c_w3"], p["c_b3"] = linear(keys[6], hidden_shapes[1], num_tasks)
    l_w, p["l_b"] = linear(keys[7], 2 * feat_dim, output_shape)
    p["l_w_share"] = l_w[:feat_dim]
    p["l_w_own"] = l_w[feat_dim:]
    return p


def reference_forward(x, p):
    relu = lambda h: jnp.maximum(h, 0.0)
    out_own = relu(relu(x @ p["fo_w1"] + p["fo_b1"]) @ p["fo_w2"] + p["fo_b2"])
    out_share = relu(relu(x @ p["fs_w1"] + p["fs_b1"]) @ p["fs_w2"] + p["fs_b2"])
    out = jnp.concatenate([out_share, out_own], axis=1)
    c = relu(out_share @ p["c_w1"] + p["c_b1"])
    c = relu(c @ p["c_w2"] + p["c_b2"])
    logits = c @ p["c_w3"] + p["c_b3"]
    task = jax.nn.softmax(logits, axis=1)
    l_w = jnp.concatenate([p["l_w_share"], p["l_w_own"]], axis=0)
    out = out @ l_w + p["l_b"]
    return out, task


if __name__ == "__main__":
    # Small config: cfg = {state_dim: 12, num_tasks: 4, hidden_shapes: [32, 32]}
    state_dim = 12
    num_tasks = 4
    hidden_shapes = [32, 32]
    output_shape = 6  # action dim

    key = jax.random.PRNGKey(0)
    kx, kp, kx2 = jax.random.split(key, 3)
    params = make_params(kp, state_dim, num_tasks, hidden_shapes, output_shape)

    # --- small-batch path (single grid step) ---
    batch = 8
    x = jax.random.normal(kx, (batch, state_dim + num_tasks), jnp.float32)
    out, task_output = net_forward(x, params, hidden_shapes, num_tasks, output_shape)
    out, task_output = jax.block_until_ready((out, task_output))

    ref_out, ref_task = reference_forward(x, params)
    assert out.shape == (batch, output_shape)
    assert task_output.shape == (batch, num_tasks)
    assert jnp.allclose(out, ref_out, atol=1e-4, rtol=1e-4)
    # task uses pl.reciprocal(approx=True) -> slightly looser tolerance
    assert jnp.allclose(task_output, ref_task, atol=1e-3, rtol=1e-3)

    # --- large-batch path (multi-step parallel grid, big row tiles) ---
    big_batch = 2500
    xb = jax.random.normal(kx2, (big_batch, state_dim + num_tasks), jnp.float32)
    out_b, task_b = net_forward(xb, params, hidden_shapes, num_tasks, output_shape)
    out_b, task_b = jax.block_until_ready((out_b, task_b))

    ref_out_b, ref_task_b = reference_forward(xb, params)
    assert out_b.shape == (big_batch, output_shape)
    assert task_b.shape == (big_batch, num_tasks)
    assert jnp.allclose(out_b, ref_out_b, atol=1e-3, rtol=1e-3)
    assert jnp.allclose(task_b, ref_task_b, atol=1e-3, rtol=1e-3)

    print("KERNEL_OK")
</pallas_src>

<mosaic_0001>
module attributes {stable_mosaic.version = 11 : i64} {
  func.func @net_kernel(%arg0: i32, %arg1: memref<8x16xf32, #tpu.memory_space<vmem>>, %arg2: memref<16x128xf32, #tpu.memory_space<vmem>>, %arg3: memref<1x128xf32, #tpu.memory_space<vmem>>, %arg4: memref<4x128x128xf32, #tpu.memory_space<vmem>>, %arg5: memref<8x128xf32, #tpu.memory_space<vmem>>) attributes {dimension_semantics = [#tpu.dimension_semantics<parallel>], iteration_bounds = array<i64: 1>, scalar_prefetch = 0 : i64, scratch_operands = 0 : i64, tpu.core_type = #tpu.core_type<tc>, window_params = [{transform_indices = @transform_0, window_bounds = array<i64: 8, 16>}, {pipeline_mode = #tpu.pipeline_mode<synchronous>, transform_indices = @transform_1, window_bounds = array<i64: 16, 128>}, {pipeline_mode = #tpu.pipeline_mode<synchronous>, transform_indices = @transform_2, window_bounds = array<i64: 1, 128>}, {pipeline_mode = #tpu.pipeline_mode<synchronous>, transform_indices = @transform_3, window_bounds = array<i64: 4, 128, 128>}, {transform_indices = @transform_4, window_bounds = array<i64: 8, 128>}]} {
    %c0 = arith.constant 0 : index
    %c0_0 = arith.constant 0 : index
    %0 = vector.load %arg1[%c0, %c0_0] : memref<8x16xf32, #tpu.memory_space<vmem>>, vector<8x16xf32>
    %c0_1 = arith.constant 0 : index
    %c0_2 = arith.constant 0 : index
    %1 = vector.load %arg2[%c0_1, %c0_2] : memref<16x128xf32, #tpu.memory_space<vmem>>, vector<16x128xf32>
    %cst = arith.constant dense<0.000000e+00> : vector<8x128xf32>
    %2 = tpu.matmul %0, %1, %cst {dimension_numbers = #tpu.dot_dimension_numbers<[1], [0], [0], [1], [0, 0, 1, 1], [], []>} : vector<8x16xf32>, vector<16x128xf32>, vector<8x128xf32> -> vector<8x128xf32>
    %c0_3 = arith.constant 0 : index
    %c0_4 = arith.constant 0 : index
    %3 = vector.load %arg3[%c0_3, %c0_4] : memref<1x128xf32, #tpu.memory_space<vmem>>, vector<1x128xf32>
    %4 = vector.broadcast %3 : vector<1x128xf32> to vector<8x128xf32>
    %5 = arith.addf %2, %4 : vector<8x128xf32>
    %cst_5 = arith.constant 0.000000e+00 : f32
    %6 = vector.broadcast %cst_5 : f32 to vector<8x128xf32>
    %7 = arith.maximumf %5, %6 : vector<8x128xf32>
    %c0_6 = arith.constant 0 : index
    %c0_7 = arith.constant 0 : index
    %c0_8 = arith.constant 0 : index
    %8 = vector.load %arg4[%c0_6, %c0_7, %c0_8] : memref<4x128x128xf32, #tpu.memory_space<vmem>>, vector<1x128x128xf32>
    %9 = vector.shape_cast %8 : vector<1x128x128xf32> to vector<128x128xf32>
    %cst_9 = arith.constant dense<0.000000e+00> : vector<8x128xf32>
    %10 = tpu.matmul %7, %9, %cst_9 {dimension_numbers = #tpu.dot_dimension_numbers<[1], [0], [0], [1], [0, 0, 1, 1], [], []>} : vector<8x128xf32>, vector<128x128xf32>, vector<8x128xf32> -> vector<8x128xf32>
    %cst_10 = arith.constant 0.000000e+00 : f32
    %11 = vector.broadcast %cst_10 : f32 to vector<8x128xf32>
    %12 = arith.maximumf %10, %11 : vector<8x128xf32>
    %c1 = arith.constant 1 : index
    %c0_11 = arith.constant 0 : index
    %c0_12 = arith.constant 0 : index
    %13 = vector.load %arg4[%c1, %c0_11, %c0_12] : memref<4x128x128xf32, #tpu.memory_space<vmem>>, vector<1x128x128xf32>
    %14 = vector.shape_cast %13 : vector<1x128x128xf32> to vector<128x128xf32>
    %cst_13 = arith.constant dense<0.000000e+00> : vector<8x128xf32>
    %15 = tpu.matmul %12, %14, %cst_13 {dimension_numbers = #tpu.dot_dimension_numbers<[1], [0], [0], [1], [0, 0, 1, 1], [], []>} : vector<8x128xf32>, vector<128x128xf32>, vector<8x128xf32> -> vector<8x128xf32>
    %cst_14 = arith.constant 0.000000e+00 : f32
    %16 = vector.broadcast %cst_14 : f32 to vector<8x128xf32>
    %17 = arith.maximumf %15, %16 : vector<8x128xf32>
    %c2 = arith.constant 2 : index
    %c0_15 = arith.constant 0 : index
    %c0_16 = arith.constant 0 : index
    %18 = vector.load %arg4[%c2, %c0_15, %c0_16] : memref<4x128x128xf32, #tpu.memory_space<vmem>>, vector<1x128x128xf32>
    %19 = vector.shape_cast %18 : vector<1x128x128xf32> to vector<128x128xf32>
    %cst_17 = arith.constant dense<0.000000e+00> : vector<8x128xf32>
    %20 = tpu.matmul %17, %19, %cst_17 {dimension_numbers = #tpu.dot_dimension_numbers<[1], [0], [0], [1], [0, 0, 1, 1], [], []>} : vector<8x128xf32>, vector<128x128xf32>, vector<8x128xf32> -> vector<8x128xf32>
    %cst_18 = arith.constant 0.000000e+00 : f32
    %21 = vector.broadcast %cst_18 : f32 to vector<8x128xf32>
    %22 = arith.maximumf %20, %21 : vector<8x128xf32>
    %c3 = arith.constant 3 : index
    %c0_19 = arith.constant 0 : index
    %c0_20 = arith.constant 0 : index
    %23 = vector.load %arg4[%c3, %c0_19, %c0_20] : memref<4x128x128xf32, #tpu.memory_space<vmem>>, vector<1x128x128xf32>
    %24 = vector.shape_cast %23 : vector<1x128x128xf32> to vector<128x128xf32>
    %cst_21 = arith.constant dense<0.000000e+00> : vector<8x128xf32>
    %25 = tpu.matmul %22, %24, %cst_21 {dimension_numbers = #tpu.dot_dimension_numbers<[1], [0], [0], [1], [0, 0, 1, 1], [], []>} : vector<8x128xf32>, vector<128x128xf32>, vector<8x128xf32> -> vector<8x128xf32>
    %26 = tpu.iota {dimensions = array<i32: 1>} : vector<1x128xi32>
    %c6_i32 = arith.constant 6 : i32
    %27 = vector.broadcast %c6_i32 : i32 to vector<1x128xi32>
    %28 = arith.cmpi sge, %26, %27 : vector<1x128xi32>
    %c10_i32 = arith.constant 10 : i32
    %29 = vector.broadcast %c10_i32 : i32 to vector<1x128xi32>
    %30 = arith.cmpi slt, %26, %29 : vector<1x128xi32>
    %31 = arith.andi %28, %30 : vector<1x128xi1>
    %cst_22 = arith.constant 0xFF800000 : f32
    %32 = vector.shape_cast %31 : vector<1x128xi1> to vector<1x128xi1>
    %33 = vector.broadcast %32 : vector<1x128xi1> to vector<8x128xi1>
    %34 = vector.broadcast %cst_22 : f32 to vector<8x128xf32>
    %35 = arith.select %33, %25, %34 : vector<8x128xi1>, vector<8x128xf32>
    %cst_23 = arith.constant dense<0xFF800000> : vector<8xf32>
    %36 = vector.multi_reduction <maximumf>, %35, %cst_23 [1] : vector<8x128xf32> to vector<8xf32>
    %37 = vector.shape_cast %36 : vector<8xf32> to vector<8x1xf32>
    %38 = vector.broadcast %37 : vector<8x1xf32> to vector<8x128xf32>
    %39 = arith.subf %35, %38 : vector<8x128xf32>
    %40 = math.exp %39 : vector<8x128xf32>
    %cst_24 = arith.constant dense<0.000000e+00> : vector<8xf32>
    %41 = vector.multi_reduction <add>, %40, %cst_24 [1] : vector<8x128xf32> to vector<8xf32>
    %42 = vector.shape_cast %41 : vector<8xf32> to vector<8x1xf32>
    %43 = tpu.reciprocal %42 {approx = true} : vector<8x1xf32> -> vector<8x1xf32>
    %44 = vector.broadcast %43 : vector<8x1xf32> to vector<8x128xf32>
    %45 = arith.mulf %40, %44 : vector<8x128xf32>
    %c6_i32_25 = arith.constant 6 : i32
    %46 = vector.broadcast %c6_i32_25 : i32 to vector<1x128xi32>
    %47 = arith.cmpi slt, %26, %46 : vector<1x128xi32>
    %48 = vector.shape_cast %47 : vector<1x128xi1> to vector<1x128xi1>
    %49 = vector.broadcast %48 : vector<1x128xi1> to vector<8x128xi1>
    %50 = arith.select %49, %15, %45 : vector<8x128xi1>, vector<8x128xf32>
    %c0_26 = arith.constant 0 : index
    %c0_27 = arith.constant 0 : index
    %51 = vector.load %arg5[%c0_26, %c0_27] : memref<8x128xf32, #tpu.memory_space<vmem>>, vector<8x128xf32>
    tpu.vector_store %arg5[%c0_26, %c0_27], %50 {strides = array<i32>} : memref<8x128xf32, #tpu.memory_space<vmem>>, vector<8x128xf32>,
    return
  }
  func.func @transform_0(%arg0: i32) -> (i32, i32) {
    %c0_i32 = arith.constant 0 : i32
    %c0_i32_0 = arith.constant 0 : i32
    return %arg0, %c0_i32 : i32, i32
  }
  func.func @transform_1(%arg0: i32) -> (i32, i32) {
    %c0_i32 = arith.constant 0 : i32
    %c0_i32_0 = arith.constant 0 : i32
    %c0_i32_1 = arith.constant 0 : i32
    return %c0_i32, %c0_i32_0 : i32, i32
  }
  func.func @transform_2(%arg0: i32) -> (i32, i32) {
    %c0_i32 = arith.constant 0 : i32
    %c0_i32_0 = arith.constant 0 : i32
    %c0_i32_1 = arith.constant 0 : i32
    return %c0_i32, %c0_i32_0 : i32, i32
  }
  func.func @transform_3(%arg0: i32) -> (i32, i32, i32) {
    %c0_i32 = arith.constant 0 : i32
    %c0_i32_0 = arith.constant 0 : i32
    %c0_i32_1 = arith.constant 0 : i32
    %c0_i32_2 = arith.constant 0 : i32
    return %c0_i32, %c0_i32_0, %c0_i32_1 : i32, i32, i32
  }
  func.func @transform_4(%arg0: i32) -> (i32, i32) {
    %c0_i32 = arith.constant 0 : i32
    %c0_i32_0 = arith.constant 0 : i32
    return %arg0, %c0_i32 : i32, i32
  }
}

</mosaic_0001>

<llo_original>
// kernel: tpu_custom_call.1
$region0: #{tpu_custom_call.1}
  #allocation0 [shape = 'u32[]', space=smem, size = 0x4, offset = 0x4, fixed_abs, tag = 'smem constant byte address 0x4 - core index']
  #allocation1 [shape = 'u32[144,128]{1,0:T(1,128)}', space=vmem, size = 0x12000, scoped, tag = 'internal scratch']
  %s0 = inlined_call_operand.hbm [shape: f32[8,16], index: 0, kind: input, shape index: {}]
  %s1 = inlined_call_operand.hbm [shape: f32[16,128], index: 1, kind: input, shape index: {}]
  %s2 = inlined_call_operand.vmem [shape: f32[1,128], index: 2, kind: input, shape index: {}]
  %s3 = inlined_call_operand.hbm [shape: f32[4,128,128], index: 3, kind: input, shape index: {}]
  %s4 = inlined_call_operand.hbm [shape: f32[8,128], index: 4, kind: output, shape index: {}]
  %s5 = sld [smem:[#allocation0]]
  $region38: #{tpu_custom_call.1} parent=0
    _
  %s7 = ssub.s32 1, %s5
  %s8 = scalar_select 0, %s7, %s5
  $region1: #{tpu_custom_call.1} parent=0
    #allocation2 [shape = 'u8[4096]{0}', space=vmem, size = 0x1000, scoped, tag = 'input window, operand 0, single buffered']
    #allocation3 [shape = 's32[1]{0}', space=sflag, size = 0x4, scoped, tag = 'scoped memory for tpu_custom_call.1']
    #allocation4 [shape = 's32[1]{0}', space=sflag, size = 0x4, scoped, tag = 'scoped memory for tpu_custom_call.1']
    #allocation5 [shape = 'u8[8192]{0}', space=vmem, size = 0x2000, scoped, tag = 'input window, operand 1, single buffered']
    #allocation6 [shape = 's32[1]{0}', space=sflag, size = 0x4, scoped, tag = 'scoped memory for tpu_custom_call.1']
    #allocation7 [shape = 'u8[262144]{0}', space=vmem, size = 0x40000, scoped, tag = 'input window, operand 3, single buffered']
    #allocation8 [shape = 'u8[4096]{0}', space=vmem, size = 0x1000, scoped, tag = 'output window, operand 0, single buffered']
    %9 = vsyncpa [#allocation3], 0
    %10 = vsyncpa [#allocation6], 0
    %11 = vsyncpa [#allocation4], 0
    // Predicated region
    $region2: #{tpu_custom_call.1} parent=1 // pred_check
      _
    $region3: #{tpu_custom_call.1} parent=1 // pred_check_branch
      %13 = sbr.rel (0) target = $region5
    $region4: #{tpu_custom_call.1} parent=1 // pred_region
      %s15 = ssub.s32 128, 128
      %16 = vsyncadd [#allocation3], %s15
      %s18 = sshll.u32 [#allocation2], 4
      %s19 = int_to_ptr.vmem [resolvable:$true] %s18
      %21 = dma.hbm_to_vmem [thread:$0]  %s0, 128, %s19, [#allocation3]
    $region5: #{tpu_custom_call.1} parent=1 // pred_fallthru
      _
    // Predicated region
    $region6: #{tpu_custom_call.1} parent=1 // pred_check
      _
    $region7: #{tpu_custom_call.1} parent=1 // pred_check_branch
      %23 = sbr.rel (0) target = $region9
    $region8: #{tpu_custom_call.1} parent=1 // pred_region
      %s25 = ssub.s32 256, 256
      %26 = vsyncadd [#allocation6], %s25
      %s27 = sshll.u32 [#allocation5], 4
      %s28 = int_to_ptr.vmem [resolvable:$true] %s27
      %33 = dma.hbm_to_vmem [thread:$0]  %s1, 256, %s28, [#allocation6], 128, 128, 8
    $region9: #{tpu_custom_call.1} parent=1 // pred_fallthru
      _
    // Predicated region
    $region10: #{tpu_custom_call.1} parent=1 // pred_check
      _
    $region11: #{tpu_custom_call.1} parent=1 // pred_check_branch
      %35 = sbr.rel (0) target = $region13
    $region12: #{tpu_custom_call.1} parent=1 // pred_region
      _
    $region13: #{tpu_custom_call.1} parent=1 // pred_fallthru
      _
    // Predicated region
    $region14: #{tpu_custom_call.1} parent=1 // pred_check
      _
    $region15: #{tpu_custom_call.1} parent=1 // pred_check_branch
      %37 = sbr.rel (0) target = $region17
    $region16: #{tpu_custom_call.1} parent=1 // pred_region
      %s39 = ssub.s32 8192, 8192
      %40 = vsyncadd [#allocation6], %s39
      %s41 = sshll.u32 [#allocation7], 4
      %s42 = int_to_ptr.vmem [resolvable:$true] %s41
      %47 = dma.hbm_to_vmem [thread:$0]  %s3, 8192, %s42, [#allocation6], 128, 128, 8
    $region17: #{tpu_custom_call.1} parent=1 // pred_fallthru
      _
    // Predicated region
    $region18: #{tpu_custom_call.1} parent=1 // pred_check
      _
    $region19: #{tpu_custom_call.1} parent=1 // pred_check_branch
      %49 = sbr.rel (0) target = $region21
    $region20: #{tpu_custom_call.1} parent=1 // pred_region
      %50 = dma.done [#allocation3], 128
    $region21: #{tpu_custom_call.1} parent=1 // pred_fallthru
      _
    // Predicated region
    $region22: #{tpu_custom_call.1} parent=1 // pred_check
      _
    $region23: #{tpu_custom_call.1} parent=1 // pred_check_branch
      %52 = sbr.rel (0) target = $region25
    $region24: #{tpu_custom_call.1} parent=1 // pred_region
      %53 = dma.done [#allocation6], 256
    $region25: #{tpu_custom_call.1} parent=1 // pred_fallthru
      _
    // Predicated region
    $region26: #{tpu_custom_call.1} parent=1 // pred_check
      _
    $region27: #{tpu_custom_call.1} parent=1 // pred_check_branch
      %55 = sbr.rel (0) target = $region29
    $region28: #{tpu_custom_call.1} parent=1 // pred_region
      %56 = dma.done [#allocation6], 8192
    $region29: #{tpu_custom_call.1} parent=1 // pred_fallthru
      _
    %v57 = vld [vmem:[#allocation2] sm:$0xff]
    %v58 = vld [vmem:[#allocation5] sm:$0xff]
    %v59 = vld [vmem:[#allocation5 + $0x8] sm:$0xff]
    %v60 = vld [vmem:[%s2] sm:$0x1]
    %v62 = vlaneseq
    %v63 = vshrl.u32 %v62, 7
    %v64 = vsub.s32 0, %v63
    %v65 = vrot.slane %v60, %v64
    %vm67 = vcmask 130048
    %v69 = vsel %vm67, %v57, 0
    %71 = vmatprep.subr.mxu0 0.0
    %72 = vmatpush1.msra.mxu0 %v58
    %73 = vmatprep.subr.mxu0 0.0
    %74 = vmatpush1.msra.mxu0 %v59
    %75 = vmatprep.subr.mxu0 0.0
    %76 = vmatpush1.msra.mxu0 0.0
    %77 = vmatprep.subr.mxu0 0.0
    %78 = vmatpush1.msra.mxu0 0.0
    %79 = vmatprep.subr.mxu0 0.0
    %80 = vmatpush1.msra.mxu0 0.0
    %81 = vmatprep.subr.mxu0 0.0
    %82 = vmatpush1.msra.mxu0 0.0
    %83 = vmatprep.subr.mxu0 0.0
    %84 = vmatpush1.msra.mxu0 0.0
    %85 = vmatprep.subr.mxu0 0.0
    %86 = vmatpush1.msra.mxu0 0.0
    %87 = vmatprep.subr.mxu0 0.0
    %88 = vmatpush1.msra.mxu0 0.0
    %89 = vmatprep.subr.mxu0 0.0
    %90 = vmatpush1.msra.mxu0 0.0
    %91 = vmatprep.subr.mxu0 0.0
    %92 = vmatpush1.msra.mxu0 0.0
    %93 = vmatprep.subr.mxu0 0.0
    %94 = vmatpush1.msra.mxu0 0.0
    %95 = vmatprep.subr.mxu0 0.0
    %96 = vmatpush1.msra.mxu0 0.0
    %97 = vmatprep.subr.mxu0 0.0
    %98 = vmatpush1.msra.mxu0 0.0
    %99 = vmatprep.subr.mxu0 0.0
    %100 = vmatpush1.msra.mxu0 0.0
    %101 = vmatprep.subr.mxu0 0.0
    %102 = vmatpush1.msra.mxu0 0.0
    %103 = vmatprep.subr.mxu0 0.0
    %104 = vmatpush1.msra.mxu0 0.0
    %105 = vmatprep.subr.mxu0 0.0
    %106 = vmatpush1.msra.mxu0 0.0
    %107 = vmatprep.subr.mxu0 0.0
    %108 = vmatpush1.msra.mxu0 0.0
    %109 = vmatprep.subr.mxu0 0.0
    %110 = vmatpush1.msra.mxu0 0.0
    %111 = vmatprep.subr.mxu0 0.0
    %112 = vmatpush1.msra.mxu0 0.0
    %113 = vmatprep.subr.mxu0 0.0
    %114 = vmatpush1.msra.mxu0 0.0
    %115 = vmatprep.subr.mxu0 0.0
    %116 = vmatpush1.msra.mxu0 0.0
    %117 = vmatprep.subr.mxu0 0.0
    %118 = vmatpush1.msra.mxu0 0.0
    %119 = vmatprep.subr.mxu0 0.0
    %120 = vmatpush1.msra.mxu0 0.0
    %121 = vmatprep.subr.mxu0 0.0
    %122 = vmatpush1.msra.mxu0 0.0
    %123 = vmatprep.subr.mxu0 0.0
    %124 = vmatpush1.msra.mxu0 0.0
    %125 = vmatprep.subr.mxu0 0.0
    %126 = vmatpush1.msra.mxu0 0.0
    %127 = vmatprep.subr.mxu0 0.0
    %128 = vmatpush1.msra.mxu0 0.0
    %129 = vmatprep.subr.mxu0 0.0
    %130 = vmatpush1.msra.mxu0 0.0
    %131 = vmatprep.subr.mxu0 0.0
    %132 = vmatpush1.msra.mxu0 0.0
    %133 = vmatprep.subr.mxu0 0.0
    %134 = vmatpush1.msra.mxu0 0.0
    %135 = vmatprep.mubr.f32.mxu0 0.0
    %136 = vmatmul.mubr.f32.gmra.mrb[0].mxu0 %v69
    %v137 = vpop.f32.mrb[0].mxu0
    %v138 = vadd.f32 %v65, %v137
    %v139 = vpop.f32.mrb[0].mxu0
    %140 = vdwg.mxu0
    %v141 = vmax.f32 %v138, 0.0
    %v142 = vld [vmem:[#allocation7] sm:$0xff]
    %v143 = vld [vmem:[#allocation7 + $0x8] sm:$0xff]
    %v144 = vld [vmem:[#allocation7 + $0x10] sm:$0xff]
    %v145 = vld [vmem:[#allocation7 + $0x18] sm:$0xff]
    %v146 = vld [vmem:[#allocation7 + $0x20] sm:$0xff]
    %v147 = vld [vmem:[#allocation7 + $0x28] sm:$0xff]
    %v148 = vld [vmem:[#allocation7 + $0x30] sm:$0xff]
    %v149 = vld [vmem:[#allocation7 + $0x38] sm:$0xff]
    %v150 = vld [vmem:[#allocation7 + $0x40] sm:$0xff]
    %v151 = vld [vmem:[#allocation7 + $0x48] sm:$0xff]
    %v152 = vld [vmem:[#allocation7 + $0x50] sm:$0xff]
    %v153 = vld [vmem:[#allocation7 + $0x58] sm:$0xff]
    %v154 = vld [vmem:[#allocation7 + $0x60] sm:$0xff]
    %v155 = vld [vmem:[#allocation7 + $0x68] sm:$0xff]
    %v156 = vld [vmem:[#allocation7 + $0x70] sm:$0xff]
    %v157 = vld [vmem:[#allocation7 + $0x78] sm:$0xff]
    %158 = vmatprep.subr.mxu0 0.0
    %159 = vmatpush1.msra.mxu0 %v142
    %160 = vmatprep.subr.mxu0 0.0
    %161 = vmatpush1.msra.mxu0 %v143
    %162 = vmatprep.subr.mxu0 0.0
    %163 = vmatpush1.msra.mxu0 %v144
    %164 = vmatprep.subr.mxu0 0.0
    %165 = vmatpush1.msra.mxu0 %v145
    %166 = vmatprep.subr.mxu0 0.0
    %167 = vmatpush1.msra.mxu0 %v146
    %168 = vmatprep.subr.mxu0 0.0
    %169 = vmatpush1.msra.mxu0 %v147
    %170 = vmatprep.subr.mxu0 0.0
    %171 = vmatpush1.msra.mxu0 %v148
    %172 = vmatprep.subr.mxu0 0.0
    %173 = vmatpush1.msra.mxu0 %v149
    %174 = vmatprep.subr.mxu0 0.0
    %175 = vmatpush1.msra.mxu0 %v150
    %176 = vmatprep.subr.mxu0 0.0
    %177 = vmatpush1.msra.mxu0 %v151
    %178 = vmatprep.subr.mxu0 0.0
    %179 = vmatpush1.msra.mxu0 %v152
    %180 = vmatprep.subr.mxu0 0.0
    %181 = vmatpush1.msra.mxu0 %v153
    %182 = vmatprep.subr.mxu0 0.0
    %183 = vmatpush1.msra.mxu0 %v154
    %184 = vmatprep.subr.mxu0 0.0
    %185 = vmatpush1.msra.mxu0 %v155
    %186 = vmatprep.subr.mxu0 0.0
    %187 = vmatpush1.msra.mxu0 %v156
    %188 = vmatprep.subr.mxu0 0.0
    %189 = vmatpush1.msra.mxu0 %v157
    %190 = vmatprep.subr.mxu0 0.0
    %191 = vmatpush1.msra.mxu0 0.0
    %192 = vmatprep.subr.mxu0 0.0
    %193 = vmatpush1.msra.mxu0 0.0
    %194 = vmatprep.subr.mxu0 0.0
    %195 = vmatpush1.msra.mxu0 0.0
    %196 = vmatprep.subr.mxu0 0.0
    %197 = vmatpush1.msra.mxu0 0.0
    %198 = vmatprep.subr.mxu0 0.0
    %199 = vmatpush1.msra.mxu0 0.0
    %200 = vmatprep.subr.mxu0 0.0
    %201 = vmatpush1.msra.mxu0 0.0
    %202 = vmatprep.subr.mxu0 0.0
    %203 = vmatpush1.msra.mxu0 0.0
    %204 = vmatprep.subr.mxu0 0.0
    %205 = vmatpush1.msra.mxu0 0.0
    %206 = vmatprep.subr.mxu0 0.0
    %207 = vmatpush1.msra.mxu0 0.0
    %208 = vmatprep.subr.mxu0 0.0
    %209 = vmatpush1.msra.mxu0 0.0
    %210 = vmatprep.subr.mxu0 0.0
    %211 = vmatpush1.msra.mxu0 0.0
    %212 = vmatprep.subr.mxu0 0.0
    %213 = vmatpush1.msra.mxu0 0.0
    %214 = vmatprep.subr.mxu0 0.0
    %215 = vmatpush1.msra.mxu0 0.0
    %216 = vmatprep.subr.mxu0 0.0
    %217 = vmatpush1.msra.mxu0 0.0
    %218 = vmatprep.subr.mxu0 0.0
    %219 = vmatpush1.msra.mxu0 0.0
    %220 = vmatprep.subr.mxu0 0.0
    %221 = vmatpush1.msra.mxu0 0.0
    %222 = vmatprep.mubr.f32.mxu0 0.0
    %223 = vmatmul.mubr.f32.gmra.mrb[0].mxu0 %v141
    %v224 = vpop.f32.mrb[0].mxu0
    %v225 = vadd.f32 0.0, %v224
    %v226 = vpop.f32.mrb[0].mxu0
    %227 = vdwg.mxu0
    %v228 = vmax.f32 %v225, 0.0
    %s229 = scalar_lea.vmem [#allocation7], 128
    %v230 = vld [vmem:[%s229] sm:$0xff]
    %v231 = vld [vmem:[%s229 + $0x8] sm:$0xff]
    %v232 = vld [vmem:[%s229 + $0x10] sm:$0xff]
    %v233 = vld [vmem:[%s229 + $0x18] sm:$0xff]
    %v234 = vld [vmem:[%s229 + $0x20] sm:$0xff]
    %v235 = vld [vmem:[%s229 + $0x28] sm:$0xff]
    %v236 = vld [vmem:[%s229 + $0x30] sm:$0xff]
    %v237 = vld [vmem:[%s229 + $0x38] sm:$0xff]
    %v238 = vld [vmem:[%s229 + $0x40] sm:$0xff]
    %v239 = vld [vmem:[%s229 + $0x48] sm:$0xff]
    %v240 = vld [vmem:[%s229 + $0x50] sm:$0xff]
    %v241 = vld [vmem:[%s229 + $0x58] sm:$0xff]
    %v242 = vld [vmem:[%s229 + $0x60] sm:$0xff]
    %v243 = vld [vmem:[%s229 + $0x68] sm:$0xff]
    %v244 = vld [vmem:[%s229 + $0x70] sm:$0xff]
    %v245 = vld [vmem:[%s229 + $0x78] sm:$0xff]
    %246 = vmatprep.subr.mxu0 0.0
    %247 = vmatpush1.msra.mxu0 %v230
    %248 = vmatprep.subr.mxu0 0.0
    %249 = vmatpush1.msra.mxu0 %v231
    %250 = vmatprep.subr.mxu0 0.0
    %251 = vmatpush1.msra.mxu0 %v232
    %252 = vmatprep.subr.mxu0 0.0
    %253 = vmatpush1.msra.mxu0 %v233
    %254 = vmatprep.subr.mxu0 0.0
    %255 = vmatpush1.msra.mxu0 %v234
    %256 = vmatprep.subr.mxu0 0.0
    %257 = vmatpush1.msra.mxu0 %v235
    %258 = vmatprep.subr.mxu0 0.0
    %259 = vmatpush1.msra.mxu0 %v236
    %260 = vmatprep.subr.mxu0 0.0
    %261 = vmatpush1.msra.mxu0 %v237
    %262 = vmatprep.subr.mxu0 0.0
    %263 = vmatpush1.msra.mxu0 %v238
    %264 = vmatprep.subr.mxu0 0.0
    %265 = vmatpush1.msra.mxu0 %v239
    %266 = vmatprep.subr.mxu0 0.0
    %267 = vmatpush1.msra.mxu0 %v240
    %268 = vmatprep.subr.mxu0 0.0
    %269 = vmatpush1.msra.mxu0 %v241
    %270 = vmatprep.subr.mxu0 0.0
    %271 = vmatpush1.msra.mxu0 %v242
    %272 = vmatprep.subr.mxu0 0.0
    %273 = vmatpush1.msra.mxu0 %v243
    %274 = vmatprep.subr.mxu0 0.0
    %275 = vmatpush1.msra.mxu0 %v244
    %276 = vmatprep.subr.mxu0 0.0
    %277 = vmatpush1.msra.mxu0 %v245
    %278 = vmatprep.subr.mxu0 0.0
    %279 = vmatpush1.msra.mxu0 0.0
    %280 = vmatprep.subr.mxu0 0.0
    %281 = vmatpush1.msra.mxu0 0.0
    %282 = vmatprep.subr.mxu0 0.0
    %283 = vmatpush1.msra.mxu0 0.0
    %284 = vmatprep.subr.mxu0 0.0
    %285 = vmatpush1.msra.mxu0 0.0
    %286 = vmatprep.subr.mxu0 0.0
    %287 = vmatpush1.msra.mxu0 0.0
    %288 = vmatprep.subr.mxu0 0.0
    %289 = vmatpush1.msra.mxu0 0.0
    %290 = vmatprep.subr.mxu0 0.0
    %291 = vmatpush1.msra.mxu0 0.0
    %292 = vmatprep.subr.mxu0 0.0
    %293 = vmatpush1.msra.mxu0 0.0
    %294 = vmatprep.subr.mxu0 0.0
    %295 = vmatpush1.msra.mxu0 0.0
    %296 = vmatprep.subr.mxu0 0.0
    %297 = vmatpush1.msra.mxu0 0.0
    %298 = vmatprep.subr.mxu0 0.0
    %299 = vmatpush1.msra.mxu0 0.0
    %300 = vmatprep.subr.mxu0 0.0
    %301 = vmatpush1.msra.mxu0 0.0
    %302 = vmatprep.subr.mxu0 0.0
    %303 = vmatpush1.msra.mxu0 0.0
    %304 = vmatprep.subr.mxu0 0.0
    %305 = vmatpush1.msra.mxu0 0.0
    %306 = vmatprep.subr.mxu0 0.0
    %307 = vmatpush1.msra.mxu0 0.0
    %308 = vmatprep.subr.mxu0 0.0
    %309 = vmatpush1.msra.mxu0 0.0
    %310 = vmatprep.mubr.f32.mxu0 0.0
    %311 = vmatmul.mubr.f32.gmra.mrb[0].mxu0 %v228
    %v312 = vpop.f32.mrb[0].mxu0
    %v313 = vadd.f32 0.0, %v312
    %v314 = vpop.f32.mrb[0].mxu0
    %315 = vdwg.mxu0
    %v316 = vmax.f32 %v313, 0.0
    %s317 = scalar_lea.vmem [#allocation7], 256
    %v318 = vld [vmem:[%s317] sm:$0xff]
    %v319 = vld [vmem:[%s317 + $0x8] sm:$0xff]
    %v320 = vld [vmem:[%s317 + $0x10] sm:$0xff]
    %v321 = vld [vmem:[%s317 + $0x18] sm:$0xff]
    %v322 = vld [vmem:[%s317 + $0x20] sm:$0xff]
    %v323 = vld [vmem:[%s317 + $0x28] sm:$0xff]
    %v324 = vld [vmem:[%s317 + $0x30] sm:$0xff]
    %v325 = vld [vmem:[%s317 + $0x38] sm:$0xff]
    %v326 = vld [vmem:[%s317 + $0x40] sm:$0xff]
    %v327 = vld [vmem:[%s317 + $0x48] sm:$0xff]
    %v328 = vld [vmem:[%s317 + $0x50] sm:$0xff]
    %v329 = vld [vmem:[%s317 + $0x58] sm:$0xff]
    %v330 = vld [vmem:[%s317 + $0x60] sm:$0xff]
    %v331 = vld [vmem:[%s317 + $0x68] sm:$0xff]
    %v332 = vld [vmem:[%s317 + $0x70] sm:$0xff]
    %v333 = vld [vmem:[%s317 + $0x78] sm:$0xff]
    %334 = vmatprep.subr.mxu0 0.0
    %335 = vmatpush1.msra.mxu0 %v318
    %336 = vmatprep.subr.mxu0 0.0
    %337 = vmatpush1.msra.mxu0 %v319
    %338 = vmatprep.subr.mxu0 0.0
    %339 = vmatpush1.msra.mxu0 %v320
    %340 = vmatprep.subr.mxu0 0.0
    %341 = vmatpush1.msra.mxu0 %v321
    %342 = vmatprep.subr.mxu0 0.0
    %343 = vmatpush1.msra.mxu0 %v322
    %344 = vmatprep.subr.mxu0 0.0
    %345 = vmatpush1.msra.mxu0 %v323
    %346 = vmatprep.subr.mxu0 0.0
    %347 = vmatpush1.msra.mxu0 %v324
    %348 = vmatprep.subr.mxu0 0.0
    %349 = vmatpush1.msra.mxu0 %v325
    %350 = vmatprep.subr.mxu0 0.0
    %351 = vmatpush1.msra.mxu0 %v326
    %352 = vmatprep.subr.mxu0 0.0
    %353 = vmatpush1.msra.mxu0 %v327
    %354 = vmatprep.subr.mxu0 0.0
    %355 = vmatpush1.msra.mxu0 %v328
    %356 = vmatprep.subr.mxu0 0.0
    %357 = vmatpush1.msra.mxu0 %v329
    %358 = vmatprep.subr.mxu0 0.0
    %359 = vmatpush1.msra.mxu0 %v330
    %360 = vmatprep.subr.mxu0 0.0
    %361 = vmatpush1.msra.mxu0 %v331
    %362 = vmatprep.subr.mxu0 0.0
    %363 = vmatpush1.msra.mxu0 %v332
    %364 = vmatprep.subr.mxu0 0.0
    %365 = vmatpush1.msra.mxu0 %v333
    %366 = vmatprep.subr.mxu0 0.0
    %367 = vmatpush1.msra.mxu0 0.0
    %368 = vmatprep.subr.mxu0 0.0
    %369 = vmatpush1.msra.mxu0 0.0
    %370 = vmatprep.subr.mxu0 0.0
    %371 = vmatpush1.msra.mxu0 0.0
    %372 = vmatprep.subr.mxu0 0.0
    %373 = vmatpush1.msra.mxu0 0.0
    %374 = vmatprep.subr.mxu0 0.0
    %375 = vmatpush1.msra.mxu0 0.0
    %376 = vmatprep.subr.mxu0 0.0
    %377 = vmatpush1.msra.mxu0 0.0
    %378 = vmatprep.subr.mxu0 0.0
    %379 = vmatpush1.msra.mxu0 0.0
    %380 = vmatprep.subr.mxu0 0.0
    %381 = vmatpush1.msra.mxu0 0.0
    %382 = vmatprep.subr.mxu0 0.0
    %383 = vmatpush1.msra.mxu0 0.0
    %384 = vmatprep.subr.mxu0 0.0
    %385 = vmatpush1.msra.mxu0 0.0
    %386 = vmatprep.subr.mxu0 0.0
    %387 = vmatpush1.msra.mxu0 0.0
    %388 = vmatprep.subr.mxu0 0.0
    %389 = vmatpush1.msra.mxu0 0.0
    %390 = vmatprep.subr.mxu0 0.0
    %391 = vmatpush1.msra.mxu0 0.0
    %392 = vmatprep.subr.mxu0 0.0
    %393 = vmatpush1.msra.mxu0 0.0
    %394 = vmatprep.subr.mxu0 0.0
    %395 = vmatpush1.msra.mxu0 0.0
    %396 = vmatprep.subr.mxu0 0.0
    %397 = vmatpush1.msra.mxu0 0.0
    %398 = vmatprep.mubr.f32.mxu0 0.0
    %399 = vmatmul.mubr.f32.gmra.mrb[0].mxu0 %v316
    %v400 = vpop.f32.mrb[0].mxu0
    %v401 = vadd.f32 0.0, %v400
    %v402 = vpop.f32.mrb[0].mxu0
    %403 = vdwg.mxu0
    %v404 = vmax.f32 %v401, 0.0
    %s405 = scalar_lea.vmem [#allocation7], 384
    %v406 = vld [vmem:[%s405] sm:$0xff]
    %v407 = vld [vmem:[%s405 + $0x8] sm:$0xff]
    %v408 = vld [vmem:[%s405 + $0x10] sm:$0xff]
    %v409 = vld [vmem:[%s405 + $0x18] sm:$0xff]
    %v410 = vld [vmem:[%s405 + $0x20] sm:$0xff]
    %v411 = vld [vmem:[%s405 + $0x28] sm:$0xff]
    %v412 = vld [vmem:[%s405 + $0x30] sm:$0xff]
    %v413 = vld [vmem:[%s405 + $0x38] sm:$0xff]
    %v414 = vld [vmem:[%s405 + $0x40] sm:$0xff]
    %v415 = vld [vmem:[%s405 + $0x48] sm:$0xff]
    %v416 = vld [vmem:[%s405 + $0x50] sm:$0xff]
    %v417 = vld [vmem:[%s405 + $0x58] sm:$0xff]
    %v418 = vld [vmem:[%s405 + $0x60] sm:$0xff]
    %v419 = vld [vmem:[%s405 + $0x68] sm:$0xff]
    %v420 = vld [vmem:[%s405 + $0x70] sm:$0xff]
    %v421 = vld [vmem:[%s405 + $0x78] sm:$0xff]
    %422 = vmatprep.subr.mxu0 0.0
    %423 = vmatpush1.msra.mxu0 %v406
    %424 = vmatprep.subr.mxu0 0.0
    %425 = vmatpush1.msra.mxu0 %v407
    %426 = vmatprep.subr.mxu0 0.0
    %427 = vmatpush1.msra.mxu0 %v408
    %428 = vmatprep.subr.mxu0 0.0
    %429 = vmatpush1.msra.mxu0 %v409
    %430 = vmatprep.subr.mxu0 0.0
    %431 = vmatpush1.msra.mxu0 %v410
    %432 = vmatprep.subr.mxu0 0.0
    %433 = vmatpush1.msra.mxu0 %v411
    %434 = vmatprep.subr.mxu0 0.0
    %435 = vmatpush1.msra.mxu0 %v412
    %436 = vmatprep.subr.mxu0 0.0
    %437 = vmatpush1.msra.mxu0 %v413
    %438 = vmatprep.subr.mxu0 0.0
    %439 = vmatpush1.msra.mxu0 %v414
    %440 = vmatprep.subr.mxu0 0.0
    %441 = vmatpush1.msra.mxu0 %v415
    %442 = vmatprep.subr.mxu0 0.0
    %443 = vmatpush1.msra.mxu0 %v416
    %444 = vmatprep.subr.mxu0 0.0
    %445 = vmatpush1.msra.mxu0 %v417
    %446 = vmatprep.subr.mxu0 0.0
    %447 = vmatpush1.msra.mxu0 %v418
    %448 = vmatprep.subr.mxu0 0.0
    %449 = vmatpush1.msra.mxu0 %v419
    %450 = vmatprep.subr.mxu0 0.0
    %451 = vmatpush1.msra.mxu0 %v420
    %452 = vmatprep.subr.mxu0 0.0
    %453 = vmatpush1.msra.mxu0 %v421
    %454 = vmatprep.subr.mxu0 0.0
    %455 = vmatpush1.msra.mxu0 0.0
    %456 = vmatprep.subr.mxu0 0.0
    %457 = vmatpush1.msra.mxu0 0.0
    %458 = vmatprep.subr.mxu0 0.0
    %459 = vmatpush1.msra.mxu0 0.0
    %460 = vmatprep.subr.mxu0 0.0
    %461 = vmatpush1.msra.mxu0 0.0
    %462 = vmatprep.subr.mxu0 0.0
    %463 = vmatpush1.msra.mxu0 0.0
    %464 = vmatprep.subr.mxu0 0.0
    %465 = vmatpush1.msra.mxu0 0.0
    %466 = vmatprep.subr.mxu0 0.0
    %467 = vmatpush1.msra.mxu0 0.0
    %468 = vmatprep.subr.mxu0 0.0
    %469 = vmatpush1.msra.mxu0 0.0
    %470 = vmatprep.subr.mxu0 0.0
    %471 = vmatpush1.msra.mxu0 0.0
    %472 = vmatprep.subr.mxu0 0.0
    %473 = vmatpush1.msra.mxu0 0.0
    %474 = vmatprep.subr.mxu0 0.0
    %475 = vmatpush1.msra.mxu0 0.0
    %476 = vmatprep.subr.mxu0 0.0
    %477 = vmatpush1.msra.mxu0 0.0
    %478 = vmatprep.subr.mxu0 0.0
    %479 = vmatpush1.msra.mxu0 0.0
    %480 = vmatprep.subr.mxu0 0.0
    %481 = vmatpush1.msra.mxu0 0.0
    %482 = vmatprep.subr.mxu0 0.0
    %483 = vmatpush1.msra.mxu0 0.0
    %484 = vmatprep.subr.mxu0 0.0
    %485 = vmatpush1.msra.mxu0 0.0
    %486 = vmatprep.mubr.f32.mxu0 0.0
    %487 = vmatmul.mubr.f32.gmra.mrb[0].mxu0 %v404
    %v488 = vpop.f32.mrb[0].mxu0
    %v489 = vadd.f32 0.0, %v488
    %v490 = vpop.f32.mrb[0].mxu0
    %491 = vdwg.mxu0
    %v492 = vlaneseq
    %v493 = vand.u32 %v492, 127
    %vm494 = vcmp.ge.s32.totalorder %v493, 6
    %vm495 = vcmp.lt.s32.totalorder %v493, 10
    %vm496 = vmand %vm494, %vm495
    %v497 = vsel %vm496, 1, 0
    %vm498 = vcmp.eq.s32.totalorder %v497, 1
    %v499 = vsel %vm498, %v489, -inf
    %500 = vmax.xlane.f32.xlu0 %v499
    %v501 = vpop.xlane.xlu0 %500
    %v502 = vsub.f32 %v499, %v501
    %v503 = vmul.f32 %v502, 1.442695
    %v504 = vpow.pop %v503
    %505 = vadd.xlane.f32.xlu0 %v504
    %v506 = vpop.xlane.xlu0 %505
    %v507 = vrcp.pop %v506
    %v508 = vmul.f32 %v504, %v507
    %vm509 = vcmp.lt.s32.totalorder %v493, 6
    %v510 = vsel %vm509, 1, 0
    %vm511 = vcmp.eq.s32.totalorder %v510, 1
    %v512 = vsel %vm511, %v313, %v508
    %513 = vst [vmem:[#allocation8] sm:$0xff] %v512
    // Predicated region
    $region30: #{tpu_custom_call.1} parent=1 // pred_check
      _
    $region31: #{tpu_custom_call.1} parent=1 // pred_check_branch
      %515 = sbr.rel (0) target = $region33
    $region32: #{tpu_custom_call.1} parent=1 // pred_region
      %s517 = ssub.s32 128, 128
      %518 = vsyncadd [#allocation4], %s517
      %s520 = sshll.u32 [#allocation8], 4
      %s521 = int_to_ptr.vmem [resolvable:$true] %s520
      %523 = dma.vmem_to_hbm [thread:$0]  %s521, 128, %s4, [#allocation4]
    $region33: #{tpu_custom_call.1} parent=1 // pred_fallthru
      _
    // Predicated region
    $region34: #{tpu_custom_call.1} parent=1 // pred_check
      _
    $region35: #{tpu_custom_call.1} parent=1 // pred_check_branch
      %525 = sbr.rel (0) target = $region37
    $region36: #{tpu_custom_call.1} parent=1 // pred_region
      %526 = dma.done [#allocation4], 128
    $region37: #{tpu_custom_call.1} parent=1 // pred_fallthru
      _
    %527 = vsyncpa [#allocation3], 1
    %528 = vsyncpa [#allocation6], 1
    %529 = vsyncpa [#allocation4], 1

</llo_original>
